<compile_context>
chip_gen: v7x
topology: tpu7x:2x2x1
jax: 0.10.0
libtpu: 0.0.40
codegen_flags: <defaults>
</compile_context>

<pallas_src>
import functools

import jax
import jax.numpy as jnp
from jax.experimental import pallas as pl
from jax.experimental.pallas import tpu as pltpu


# ---------------------------------------------------------------------------
# Pass 1: fused K|V projection, emitted head-major (B, H, Sk, d_kv).
# ---------------------------------------------------------------------------
def _kv_proj_kernel(kv_ref, wkv_ref, k_out_ref, v_out_ref, *, d_kv, inner):
    kv = kv_ref[0].astype(jnp.bfloat16)                                   # (tk, D)
    # One wide matmul for K and V together (N = 2*inner).
    proj = jnp.dot(kv, wkv_ref[...], preferred_element_type=jnp.float32)  # (tk, 2*inner)
    n_heads = k_out_ref.shape[1]
    for h in range(n_heads):               # static unroll: cheap in-VMEM lane slices
        lo = h * d_kv
        k_out_ref[0, h] = proj[:, lo:lo + d_kv].astype(k_out_ref.dtype)
        v_out_ref[0, h] = proj[:, inner + lo:inner + lo + d_kv].astype(v_out_ref.dtype)


# ---------------------------------------------------------------------------
# Pass 2: fused LayerNorm + Q-proj + attention + O-proj + residual.
# Grid = (batch, q_tile, head); head is the innermost "arbitrary" axis.
# ---------------------------------------------------------------------------
def _attn_core_kernel(h_ref, k_ref, v_ref, wq_ref, wo_ref, lnw_ref, out_ref,
                      q_scr, ctx_scr, *, eps, d_kv, kv_resident):
    head = pl.program_id(2)

    @pl.when(head == 0)
    def _init():
        # UdopLayerNorm: RMS norm, fp32 variance, no mean subtraction, no bias.
        x = h_ref[0].astype(jnp.float32)                                  # (tq, D)
        var = jnp.mean(x * x, axis=-1, keepdims=True)
        normed = (x * jax.lax.rsqrt(var + eps)) * lnw_ref[...].astype(jnp.float32)
        # Full-width Q projection (N = inner) once per (batch, q_tile), then head-major
        # relayout so per-head access is a cheap leading-dim index.
        q_full = jnp.dot(normed.astype(jnp.bfloat16), wq_ref[...],
                         preferred_element_type=jnp.float32)              # (tq, inner)
        for h in range(q_scr.shape[0]):
            q_scr[h] = q_full[:, h * d_kv:(h + 1) * d_kv].astype(jnp.bfloat16)

    q_h = q_scr[head]                                   # (tq, d_kv) bf16
    if kv_resident:
        k_h = k_ref[0, head]                            # (Sk, d_kv) bf16 (VMEM-resident)
        v_h = v_ref[0, head]
    else:
        k_h = k_ref[0, 0]                               # streamed per head
        v_h = v_ref[0, 0]

    # scores = q @ k^T  (T5: no 1/sqrt(d) scaling; position_bias == 0 on this path)
    scores = jax.lax.dot_general(q_h, k_h, (((1,), (1,)), ((), ())),
                                 preferred_element_type=jnp.float32)      # (tq, Sk)
    m = jnp.max(scores, axis=-1, keepdims=True)
    p = jnp.exp(scores - m)                                               # (tq, Sk) f32
    denom = jnp.sum(p, axis=-1, keepdims=True)                            # (tq, 1)
    ctx = jnp.dot(p.astype(jnp.bfloat16), v_h,
                  preferred_element_type=jnp.float32)                     # (tq, d_kv)
    # Normalize the small ctx tile (not the (tq, Sk) probs); reciprocal on the EUP.
    ctx = ctx * pl.reciprocal(denom, approx=True)
    ctx_scr[head] = ctx.astype(jnp.bfloat16)

    @pl.when(head == pl.num_programs(2) - 1)
    def _finalize():
        n_heads = ctx_scr.shape[0]
        # Head-major -> lane-dense (tq, inner) (matches torch unshape()), then ONE
        # full-contraction-depth output projection + residual.
        ctx_full = jnp.concatenate([ctx_scr[h] for h in range(n_heads)], axis=-1)
        attn_out = jnp.dot(ctx_full, wo_ref[...], preferred_element_type=jnp.float32)
        out_ref[0] = (h_ref[0].astype(jnp.float32) + attn_out).astype(out_ref.dtype)


# ---------------------------------------------------------------------------
# Wrapper
# ---------------------------------------------------------------------------
def udop_layer_cross_attention(hidden_states, key_value_states, params,
                               *, n_heads, d_kv, eps=1e-6):
    B, Sq, D = hidden_states.shape
    _, Sk, _ = key_value_states.shape
    inner = n_heads * d_kv
    bf16 = jnp.bfloat16
    itemsize_h = jnp.dtype(hidden_states.dtype).itemsize

    # bf16 weights: MXU-native dtype, halves weight DMA; fp32 accumulation in-kernel.
    wq = params["wq"].astype(bf16)                                         # (D, inner)
    wkv = jnp.concatenate([params["wk"], params["wv"]], axis=1).astype(bf16)  # (D, 2*inner)
    wo = params["wo"].astype(bf16)                                         # (inner, D)
    ln_w = params["ln_w"].astype(jnp.float32).reshape(1, D)

    # ---- pass 1: fused K|V projection, head-major output (no XLA transpose pass) ----
    tk = min(Sk, 512)
    nk = pl.cdiv(Sk, tk)
    k_heads, v_heads = pl.pallas_call(
        functools.partial(_kv_proj_kernel, d_kv=d_kv, inner=inner),
        out_shape=(jax.ShapeDtypeStruct((B, n_heads, Sk, d_kv), bf16),
                   jax.ShapeDtypeStruct((B, n_heads, Sk, d_kv), bf16)),
        grid=(B, nk),
        in_specs=[
            pl.BlockSpec((1, tk, D), lambda b, j: (b, j, 0)),              # key_value_states
            pl.BlockSpec((D, 2 * inner), lambda b, j: (0, 0)),             # Wk|Wv (resident)
        ],
        out_specs=(pl.BlockSpec((1, n_heads, tk, d_kv), lambda b, j: (b, 0, j, 0)),
                   pl.BlockSpec((1, n_heads, tk, d_kv), lambda b, j: (b, 0, j, 0))),
        compiler_params=pltpu.CompilerParams(
            dimension_semantics=("parallel", "parallel"),
            vmem_limit_bytes=32 * 1024 * 1024),
    )(key_value_states, wkv)

    # ---- pass 2: fused attention layer ----
    tq = min(Sq, 256)
    # v7x has 2 TensorCores per chip: make sure the parallel grid axes expose >= 2
    # units of work (only relevant for B == 1 with short Sq).
    while B * pl.cdiv(Sq, tq) < 2 and tq >= 16 and tq % 16 == 0:
        tq //= 2
    nq = pl.cdiv(Sq, tq)

    # Conservative VMEM budget (fits v7x's 32 MiB scoped default). Keep full-head K/V
    # resident per batch element when it fits; otherwise stream one head at a time.
    def _pass2_vmem(kv_bytes):
        return (kv_bytes
                + 2 * 2 * 2 * D * inner                    # Wq + Wo bf16, x2 buffers
                + 2 * 2 * tq * D * itemsize_h              # hidden + out tiles, x2 buffers
                + 2 * n_heads * tq * d_kv * 2              # q / ctx head-major scratch
                + 4 * tq * Sk * 4                          # scores / exp f32 temporaries
                + 2 * tq * inner * 4)                      # q_full / attn_out temporaries
    kv_resident_bytes = 2 * 2 * n_heads * Sk * d_kv * 2    # K+V blocks, x2 buffers, bf16
    VMEM_BUDGET = 30 * 1024 * 1024
    kv_resident = _pass2_vmem(kv_resident_bytes) <= VMEM_BUDGET

    if kv_resident:
        kv_spec = pl.BlockSpec((1, n_heads, Sk, d_kv), lambda b, i, h: (b, 0, 0, 0))
    else:
        kv_spec = pl.BlockSpec((1, 1, Sk, d_kv), lambda b, i, h: (b, h, 0, 0))

    flops = int(2 * B * Sq * (D * inner                    # Q projection
                              + 2 * n_heads * Sk * d_kv    # QK^T + attn @ V
                              + inner * D))                # output projection
    bytes_accessed = int(
        2 * hidden_states.size * itemsize_h                # hidden read + output write
        + (k_heads.size + v_heads.size) * 2                # bf16 K/V
        + (wq.size + wo.size) * 2 + ln_w.size * 4)

    layer_output = pl.pallas_call(
        functools.partial(_attn_core_kernel, eps=eps, d_kv=d_kv, kv_resident=kv_resident),
        out_shape=jax.ShapeDtypeStruct((B, Sq, D), hidden_states.dtype),
        grid=(B, nq, n_heads),
        in_specs=[
            pl.BlockSpec((1, tq, D), lambda b, i, h: (b, i, 0)),           # hidden tile
            kv_spec,                                                       # K
            kv_spec,                                                       # V
            pl.BlockSpec((D, inner), lambda b, i, h: (0, 0)),              # Wq (grid-resident)
            pl.BlockSpec((inner, D), lambda b, i, h: (0, 0)),              # Wo (grid-resident)
            pl.BlockSpec((1, D), lambda b, i, h: (0, 0)),                  # LN weight
        ],
        out_specs=pl.BlockSpec((1, tq, D), lambda b, i, h: (b, i, 0)),
        scratch_shapes=[pltpu.VMEM((n_heads, tq, d_kv), bf16),   # head-major Q cache
                        pltpu.VMEM((n_heads, tq, d_kv), bf16)],  # head-major ctx cache
        compiler_params=pltpu.CompilerParams(
            dimension_semantics=("parallel", "parallel", "arbitrary"),
            vmem_limit_bytes=32 * 1024 * 1024),
        cost_estimate=pl.CostEstimate(flops=flops,
                                      transcendentals=int(B * n_heads * Sq * Sk),
                                      bytes_accessed=bytes_accessed),
    )(hidden_states, k_heads, v_heads, wq, wo, ln_w)

    # T5 convention: no relative bias, no mask -> zero position bias in scores dtype (f32).
    # Kept only for API parity; DCE'd under jit when the caller does not consume it.
    position_bias = jnp.zeros((1, n_heads, Sq, Sk), dtype=jnp.float32)
    present_key_value = None
    return layer_output, present_key_value, position_bias


# ---------------------------------------------------------------------------
# Pure-JAX reference mirroring the PyTorch forward (fp32).
# ---------------------------------------------------------------------------
def _reference(hidden_states, key_value_states, params, *, n_heads, d_kv, eps=1e-6):
    h32 = hidden_states.astype(jnp.float32)
    var = jnp.mean(h32 * h32, axis=-1, keepdims=True)
    normed = params["ln_w"].reshape(1, -1) * (h32 * jax.lax.rsqrt(var + eps))
    q = normed @ params["wq"]
    k = key_value_states.astype(jnp.float32) @ params["wk"]
    v = key_value_states.astype(jnp.float32) @ params["wv"]
    B, Sq, _ = q.shape
    Sk = k.shape[1]
    q = q.reshape(B, Sq, n_heads, d_kv).transpose(0, 2, 1, 3)
    k = k.reshape(B, Sk, n_heads, d_kv).transpose(0, 2, 1, 3)
    v = v.reshape(B, Sk, n_heads, d_kv).transpose(0, 2, 1, 3)
    scores = jnp.einsum("bhqd,bhkd->bhqk", q, k)
    attn = jax.nn.softmax(scores, axis=-1)
    ctx = jnp.einsum("bhqk,bhkd->bhqd", attn, v)
    ctx = ctx.transpose(0, 2, 1, 3).reshape(B, Sq, n_heads * d_kv)
    return hidden_states + ctx @ params["wo"]


if __name__ == "__main__":
    # Small, module-consistent config: d_model=32, num_heads=4, d_kv=8 (inner=32).
    B, Sq, Sk, D = 2, 8, 16, 32
    n_heads, d_kv = 4, 8
    inner = n_heads * d_kv
    eps = 1e-6

    key = jax.random.PRNGKey(0)
    k_h, k_kv, k_q, k_k, k_v, k_o, k_ln = jax.random.split(key, 7)

    hidden_states = jax.random.normal(k_h, (B, Sq, D), dtype=jnp.float32)
    key_value_states = jax.random.normal(k_kv, (B, Sk, D), dtype=jnp.float32)

    params = {
        # stored as (in_features, out_features): x @ W == torch's x @ W_pt.T
        "wq": jax.random.normal(k_q, (D, inner), dtype=jnp.float32) * 0.05,
        "wk": jax.random.normal(k_k, (D, inner), dtype=jnp.float32) * 0.05,
        "wv": jax.random.normal(k_v, (D, inner), dtype=jnp.float32) * 0.05,
        "wo": jax.random.normal(k_o, (inner, D), dtype=jnp.float32) * 0.05,
        "ln_w": 1.0 + 0.1 * jax.random.normal(k_ln, (1, D), dtype=jnp.float32),
    }

    out, present_kv, pos_bias = udop_layer_cross_attention(
        hidden_states, key_value_states, params, n_heads=n_heads, d_kv=d_kv, eps=eps)
    out = jax.block_until_ready(out)

    ref = _reference(hidden_states, key_value_states, params,
                     n_heads=n_heads, d_kv=d_kv, eps=eps)

    assert out.shape == (B, Sq, D)
    assert pos_bias.shape == (1, n_heads, Sq, Sk)
    assert present_kv is None
    # bf16 operands with fp32 accumulation -> loose-but-safe tolerance vs fp32 reference.
    assert jnp.allclose(out, ref, atol=2e-2, rtol=2e-2), "mismatch vs reference"
    print("KERNEL_OK")
</pallas_src>

<mosaic_0001>
module attributes {stable_mosaic.version = 11 : i64} {
  func.func @_kv_proj_kernel(%arg0: i32, %arg1: i32, %arg2: memref<1x16x32xf32, #tpu.memory_space<vmem>>, %arg3: memref<32x64xbf16, #tpu.memory_space<vmem>>, %arg4: memref<1x4x16x8xbf16, #tpu.memory_space<vmem>>, %arg5: memref<1x4x16x8xbf16, #tpu.memory_space<vmem>>) attributes {dimension_semantics = [#tpu.dimension_semantics<parallel>, #tpu.dimension_semantics<parallel>], iteration_bounds = array<i64: 2, 1>, scalar_prefetch = 0 : i64, scratch_operands = 0 : i64, tpu.core_type = #tpu.core_type<tc>, window_params = [{transform_indices = @transform_0, window_bounds = array<i64: 1, 16, 32>}, {pipeline_mode = #tpu.pipeline_mode<synchronous>, transform_indices = @transform_1, window_bounds = array<i64: 32, 64>}, {transform_indices = @transform_2, window_bounds = array<i64: 1, 4, 16, 8>}, {transform_indices = @transform_3, window_bounds = array<i64: 1, 4, 16, 8>}]} {
    %c0 = arith.constant 0 : index
    %c0_0 = arith.constant 0 : index
    %c0_1 = arith.constant 0 : index
    %0 = vector.load %arg2[%c0, %c0_0, %c0_1] : memref<1x16x32xf32, #tpu.memory_space<vmem>>, vector<1x16x32xf32>
    %1 = vector.shape_cast %0 : vector<1x16x32xf32> to vector<16x32xf32>
    %2 = arith.truncf %1 : vector<16x32xf32> to vector<16x32xbf16>
    %c0_2 = arith.constant 0 : index
    %c0_3 = arith.constant 0 : index
    %3 = vector.load %arg3[%c0_2, %c0_3] : memref<32x64xbf16, #tpu.memory_space<vmem>>, vector<32x64xbf16>
    %cst = arith.constant dense<0.000000e+00> : vector<16x64xf32>
    %4 = tpu.matmul %2, %3, %cst {dimension_numbers = #tpu.dot_dimension_numbers<[1], [0], [0], [1], [0, 0, 1, 1], [], []>} : vector<16x32xbf16>, vector<32x64xbf16>, vector<16x64xf32> -> vector<16x64xf32>
    %5 = vector.extract_strided_slice %4 {offsets = [0, 0], sizes = [16, 8], strides = [1, 1]} : vector<16x64xf32> to vector<16x8xf32>
    %6 = arith.truncf %5 : vector<16x8xf32> to vector<16x8xbf16>
    %c0_4 = arith.constant 0 : index
    %c0_5 = arith.constant 0 : index
    %c0_6 = arith.constant 0 : index
    %c0_7 = arith.constant 0 : index
    %7 = vector.load %arg4[%c0_4, %c0_5, %c0_6, %c0_7] : memref<1x4x16x8xbf16, #tpu.memory_space<vmem>>, vector<1x1x16x8xbf16>
    %8 = vector.shape_cast %7 : vector<1x1x16x8xbf16> to vector<16x8xbf16>
    %9 = vector.shape_cast %6 : vector<16x8xbf16> to vector<1x1x16x8xbf16>
    tpu.vector_store %arg4[%c0_4, %c0_5, %c0_6, %c0_7], %9 {strides = array<i32>} : memref<1x4x16x8xbf16, #tpu.memory_space<vmem>>, vector<1x1x16x8xbf16>,
    %10 = vector.extract_strided_slice %4 {offsets = [0, 32], sizes = [16, 8], strides = [1, 1]} : vector<16x64xf32> to vector<16x8xf32>
    %11 = arith.truncf %10 : vector<16x8xf32> to vector<16x8xbf16>
    %c0_8 = arith.constant 0 : index
    %c0_9 = arith.constant 0 : index
    %c0_10 = arith.constant 0 : index
    %c0_11 = arith.constant 0 : index
    %12 = vector.load %arg5[%c0_8, %c0_9, %c0_10, %c0_11] : memref<1x4x16x8xbf16, #tpu.memory_space<vmem>>, vector<1x1x16x8xbf16>
    %13 = vector.shape_cast %12 : vector<1x1x16x8xbf16> to vector<16x8xbf16>
    %14 = vector.shape_cast %11 : vector<16x8xbf16> to vector<1x1x16x8xbf16>
    tpu.vector_store %arg5[%c0_8, %c0_9, %c0_10, %c0_11], %14 {strides = array<i32>} : memref<1x4x16x8xbf16, #tpu.memory_space<vmem>>, vector<1x1x16x8xbf16>,
    %15 = vector.extract_strided_slice %4 {offsets = [0, 8], sizes = [16, 8], strides = [1, 1]} : vector<16x64xf32> to vector<16x8xf32>
    %16 = arith.truncf %15 : vector<16x8xf32> to vector<16x8xbf16>
    %c0_12 = arith.constant 0 : index
    %c1 = arith.constant 1 : index
    %c0_13 = arith.constant 0 : index
    %c0_14 = arith.constant 0 : index
    %17 = vector.load %arg4[%c0_12, %c1, %c0_13, %c0_14] : memref<1x4x16x8xbf16, #tpu.memory_space<vmem>>, vector<1x1x16x8xbf16>
    %18 = vector.shape_cast %17 : vector<1x1x16x8xbf16> to vector<16x8xbf16>
    %19 = vector.shape_cast %16 : vector<16x8xbf16> to vector<1x1x16x8xbf16>
    tpu.vector_store %arg4[%c0_12, %c1, %c0_13, %c0_14], %19 {strides = array<i32>} : memref<1x4x16x8xbf16, #tpu.memory_space<vmem>>, vector<1x1x16x8xbf16>,
    %20 = vector.extract_strided_slice %4 {offsets = [0, 40], sizes = [16, 8], strides = [1, 1]} : vector<16x64xf32> to vector<16x8xf32>
    %21 = arith.truncf %20 : vector<16x8xf32> to vector<16x8xbf16>
    %c0_15 = arith.constant 0 : index
    %c1_16 = arith.constant 1 : index
    %c0_17 = arith.constant 0 : index
    %c0_18 = arith.constant 0 : index
    %22 = vector.load %arg5[%c0_15, %c1_16, %c0_17, %c0_18] : memref<1x4x16x8xbf16, #tpu.memory_space<vmem>>, vector<1x1x16x8xbf16>
    %23 = vector.shape_cast %22 : vector<1x1x16x8xbf16> to vector<16x8xbf16>
    %24 = vector.shape_cast %21 : vector<16x8xbf16> to vector<1x1x16x8xbf16>
    tpu.vector_store %arg5[%c0_15, %c1_16, %c0_17, %c0_18], %24 {strides = array<i32>} : memref<1x4x16x8xbf16, #tpu.memory_space<vmem>>, vector<1x1x16x8xbf16>,
    %25 = vector.extract_strided_slice %4 {offsets = [0, 16], sizes = [16, 8], strides = [1, 1]} : vector<16x64xf32> to vector<16x8xf32>
    %26 = arith.truncf %25 : vector<16x8xf32> to vector<16x8xbf16>
    %c0_19 = arith.constant 0 : index
    %c2 = arith.constant 2 : index
    %c0_20 = arith.constant 0 : index
    %c0_21 = arith.constant 0 : index
    %27 = vector.load %arg4[%c0_19, %c2, %c0_20, %c0_21] : memref<1x4x16x8xbf16, #tpu.memory_space<vmem>>, vector<1x1x16x8xbf16>
    %28 = vector.shape_cast %27 : vector<1x1x16x8xbf16> to vector<16x8xbf16>
    %29 = vector.shape_cast %26 : vector<16x8xbf16> to vector<1x1x16x8xbf16>
    tpu.vector_store %arg4[%c0_19, %c2, %c0_20, %c0_21], %29 {strides = array<i32>} : memref<1x4x16x8xbf16, #tpu.memory_space<vmem>>, vector<1x1x16x8xbf16>,
    %30 = vector.extract_strided_slice %4 {offsets = [0, 48], sizes = [16, 8], strides = [1, 1]} : vector<16x64xf32> to vector<16x8xf32>
    %31 = arith.truncf %30 : vector<16x8xf32> to vector<16x8xbf16>
    %c0_22 = arith.constant 0 : index
    %c2_23 = arith.constant 2 : index
    %c0_24 = arith.constant 0 : index
    %c0_25 = arith.constant 0 : index
    %32 = vector.load %arg5[%c0_22, %c2_23, %c0_24, %c0_25] : memref<1x4x16x8xbf16, #tpu.memory_space<vmem>>, vector<1x1x16x8xbf16>
    %33 = vector.shape_cast %32 : vector<1x1x16x8xbf16> to vector<16x8xbf16>
    %34 = vector.shape_cast %31 : vector<16x8xbf16> to vector<1x1x16x8xbf16>
    tpu.vector_store %arg5[%c0_22, %c2_23, %c0_24, %c0_25], %34 {strides = array<i32>} : memref<1x4x16x8xbf16, #tpu.memory_space<vmem>>, vector<1x1x16x8xbf16>,
    %35 = vector.extract_strided_slice %4 {offsets = [0, 24], sizes = [16, 8], strides = [1, 1]} : vector<16x64xf32> to vector<16x8xf32>
    %36 = arith.truncf %35 : vector<16x8xf32> to vector<16x8xbf16>
    %c0_26 = arith.constant 0 : index
    %c3 = arith.constant 3 : index
    %c0_27 = arith.constant 0 : index
    %c0_28 = arith.constant 0 : index
    %37 = vector.load %arg4[%c0_26, %c3, %c0_27, %c0_28] : memref<1x4x16x8xbf16, #tpu.memory_space<vmem>>, vector<1x1x16x8xbf16>
    %38 = vector.shape_cast %37 : vector<1x1x16x8xbf16> to vector<16x8xbf16>
    %39 = vector.shape_cast %36 : vector<16x8xbf16> to vector<1x1x16x8xbf16>
    tpu.vector_store %arg4[%c0_26, %c3, %c0_27, %c0_28], %39 {strides = array<i32>} : memref<1x4x16x8xbf16, #tpu.memory_space<vmem>>, vector<1x1x16x8xbf16>,
    %40 = vector.extract_strided_slice %4 {offsets = [0, 56], sizes = [16, 8], strides = [1, 1]} : vector<16x64xf32> to vector<16x8xf32>
    %41 = arith.truncf %40 : vector<16x8xf32> to vector<16x8xbf16>
    %c0_29 = arith.constant 0 : index
    %c3_30 = arith.constant 3 : index
    %c0_31 = arith.constant 0 : index
    %c0_32 = arith.constant 0 : index
    %42 = vector.load %arg5[%c0_29, %c3_30, %c0_31, %c0_32] : memref<1x4x16x8xbf16, #tpu.memory_space<vmem>>, vector<1x1x16x8xbf16>
    %43 = vector.shape_cast %42 : vector<1x1x16x8xbf16> to vector<16x8xbf16>
    %44 = vector.shape_cast %41 : vector<16x8xbf16> to vector<1x1x16x8xbf16>
    tpu.vector_store %arg5[%c0_29, %c3_30, %c0_31, %c0_32], %44 {strides = array<i32>} : memref<1x4x16x8xbf16, #tpu.memory_space<vmem>>, vector<1x1x16x8xbf16>,
    return
  }
  func.func @transform_0(%arg0: i32, %arg1: i32) -> (i32, i32, i32) {
    %c0_i32 = arith.constant 0 : i32
    %c0_i32_0 = arith.constant 0 : i32
    return %arg0, %arg1, %c0_i32 : i32, i32, i32
  }
  func.func @transform_1(%arg0: i32, %arg1: i32) -> (i32, i32) {
    %c0_i32 = arith.constant 0 : i32
    %c0_i32_0 = arith.constant 0 : i32
    %c0_i32_1 = arith.constant 0 : i32
    return %c0_i32, %c0_i32_0 : i32, i32
  }
  func.func @transform_2(%arg0: i32, %arg1: i32) -> (i32, i32, i32, i32) {
    %c0_i32 = arith.constant 0 : i32
    %c0_i32_0 = arith.constant 0 : i32
    %c0_i32_1 = arith.constant 0 : i32
    return %arg0, %c0_i32, %arg1, %c0_i32_0 : i32, i32, i32, i32
  }
  func.func @transform_3(%arg0: i32, %arg1: i32) -> (i32, i32, i32, i32) {
    %c0_i32 = arith.constant 0 : i32
    %c0_i32_0 = arith.constant 0 : i32
    %c0_i32_1 = arith.constant 0 : i32
    return %arg0, %c0_i32, %arg1, %c0_i32_0 : i32, i32, i32, i32
  }
}

</mosaic_0001>

<llo_original>
// kernel: tpu_custom_call.1
$region0: #{tpu_custom_call.1}
  #allocation0 [shape = 'u32[]', space=smem, size = 0x4, offset = 0x4, fixed_abs, tag = 'smem constant byte address 0x4 - core index']
  #allocation1 [shape = 'u32[144,128]{1,0:T(1,128)}', space=vmem, size = 0x12000, scoped, tag = 'internal scratch']
  %s0 = inlined_call_operand.hbm [shape: f32[2,16,32], index: 0, kind: input, shape index: {}]
  %s1 = inlined_call_operand.hbm [shape: bf16[32,64], index: 1, kind: input, shape index: {}]
  %s2 = inlined_call_operand.vmem [shape: bf16[2,4,16,8], index: 2, kind: output, shape index: {0}]
  %s3 = inlined_call_operand.vmem [shape: bf16[2,4,16,8], index: 3, kind: output, shape index: {1}]
  %4 = xla_tuple %s2, %s3
  %s5 = sld [smem:[#allocation0]]
  $region57: #{tpu_custom_call.1} parent=0
    _
  %s7 = ssub.s32 1, %s5
  %s8 = scalar_select 0, %s7, %s5
  $region1: #{tpu_custom_call.1} parent=0
    #allocation2 [shape = 'u8[16384]{0}', space=vmem, size = 0x4000, scoped, tag = 'input window, operand 0']
    #allocation3 [shape = 's32[2]{0}', space=sflag, size = 0x8, scoped, tag = 'scoped memory for tpu_custom_call.1']
    #allocation4 [shape = 'u8[8192]{0}', space=vmem, size = 0x2000, scoped, tag = 'input window, operand 1, single buffered']
    #allocation5 [shape = 's32[1]{0}', space=sflag, size = 0x4, scoped, tag = 'scoped memory for tpu_custom_call.1']
    %9 = vsyncpa [#allocation3], 0
    %s10 = scalar_lea.sflag [#allocation3], 1
    %11 = vsyncpa %s10, 0
    %12 = vsyncpa [#allocation5], 0
    loop: start=0, step=1, limit=4
    $region2: #{tpu_custom_call.1} parent=1 // loop_pre_header
      _
    $region3: #{tpu_custom_call.1} parent=1 // loop_header
      %s14 = sphi 0, %s18
      %p15 = scmp.ge.s32.totalorder %s14, 4
      %s21 = sphi 0, %s33
      %s22 = sphi 0, %s29
      %s23 = sphi 0, %s21
      %s24 = sphi 0, %s22
      %s25 = sphi 0, %s23
      %s26 = sphi 0, %s24
      %s38 = sphi 0, %s40
      %s41 = sphi 0, %s38
      %s42 = sphi 0, %s41
      %s58 = sphi 0, %s42
      %s62 = sphi 0, %s62
      %s64 = sphi 0, %s62
      %s65 = sphi 0, %s64
      %s79 = sphi 0, %s65
      %s87 = sphi 0, %s89
      %s90 = sphi 0, %s87
      %s91 = sphi 0, %s90
      %s107 = sphi 0, %s91
      %s115 = sphi 0, %s117
      %s118 = sphi 0, %s115
      %s119 = sphi 0, %s118
      %s135 = sphi 0, %s119
    $region4: #{tpu_custom_call.1} parent=1 // loop_header_branch
      %17 = sbr.rel (%p15) target = $region8
    $region5: #{tpu_custom_call.1} parent=1 // loop_body
      %s19 = ssub.s32 %s14, 1
      %s20 = ssub.s32 %s14, 2
      %s27 = sadd.s32 1, %s22
      %p28 = scmp.ge.s32.totalorder %s27, 1
      %s29 = scalar_select %p28, 0, %s27
      %s30 = sadd.s32 1, %s21
      %s31 = scalar_select %p28, %s30, %s21
      %p32 = scmp.ge.s32.totalorder %s31, 2
      %s33 = scalar_select %p32, 0, %s31
      %s34 = ssub.s32 %s21, %s33
      %s35 = ssub.s32 %s22, %s29
      %s36 = sor.u32 %s34, %s35
      %p37 = scmp.eq.s32.totalorder %s36, 0
      %s39 = sadd.s32 %s38, 1
      %s40 = scalar_select %p37, %s38, %s39
      %p43 = pneg %p37
      %p44 = scmp.eq.s32.totalorder %s14, 1
      %p45 = por %p43, %p44
      %p46 = scmp.ne.s32.totalorder %s38, %s41
      %p47 = scmp.eq.s32.totalorder %s14, 0
      %p48 = por %p46, %p47
      %p49 = scmp.ne.s32.totalorder %s38, %s41
      %p50 = scmp.eq.s32.totalorder %s19, 1
      %p51 = por %p49, %p50
      %p52 = scmp.ne.s32.totalorder %s41, %s42
      %p53 = scmp.eq.s32.totalorder %s19, 0
      %p54 = por %p52, %p53
      %p55 = scmp.ne.s32.totalorder %s41, %s42
      %p56 = scmp.eq.s32.totalorder %s20, 1
      %p57 = por %p55, %p56
      %p59 = scmp.ne.s32.totalorder %s42, %s58
      %p60 = scmp.eq.s32.totalorder %s20, 0
      %p61 = por %p59, %p60
      %s63 = sadd.s32 %s62, 1
      %p66 = scmp.eq.s32.totalorder %s14, 1
      %p67 = scmp.ne.s32.totalorder %s62, %s64
      %p68 = scmp.eq.s32.totalorder %s14, 0
      %p69 = por %p67, %p68
      %p70 = scmp.ne.s32.totalorder %s62, %s64
      %p71 = scmp.eq.s32.totalorder %s19, 1
      %p72 = por %p70, %p71
      %p73 = scmp.ne.s32.totalorder %s64, %s65
      %p74 = scmp.eq.s32.totalorder %s19, 0
      %p75 = por %p73, %p74
      %p76 = scmp.ne.s32.totalorder %s64, %s65
      %p77 = scmp.eq.s32.totalorder %s20, 1
      %p78 = por %p76, %p77
      %p80 = scmp.ne.s32.totalorder %s65, %s79
      %p81 = scmp.eq.s32.totalorder %s20, 0
      %p82 = por %p80, %p81
      %s83 = ssub.s32 %s21, %s33
      %s84 = ssub.s32 %s22, %s29
      %s85 = sor.u32 %s83, %s84
      %p86 = scmp.eq.s32.totalorder %s85, 0
      %s88 = sadd.s32 %s87, 1
      %s89 = scalar_select %p86, %s87, %s88
      %p92 = pneg %p86
      %p93 = scmp.eq.s32.totalorder %s14, 1
      %p94 = por %p92, %p93
      %p95 = scmp.ne.s32.totalorder %s87, %s90
      %p96 = scmp.eq.s32.totalorder %s14, 0
      %p97 = por %p95, %p96
      %p98 = scmp.ne.s32.totalorder %s87, %s90
      %p99 = scmp.eq.s32.totalorder %s19, 1
      %p100 = por %p98, %p99
      %p101 = scmp.ne.s32.totalorder %s90, %s91
      %p102 = scmp.eq.s32.totalorder %s19, 0
      %p103 = por %p101, %p102
      %p104 = scmp.ne.s32.totalorder %s90, %s91
      %p105 = scmp.eq.s32.totalorder %s20, 1
      %p106 = por %p104, %p105
      %p108 = scmp.ne.s32.totalorder %s91, %s107
      %p109 = scmp.eq.s32.totalorder %s20, 0
      %p110 = por %p108, %p109
      %s111 = ssub.s32 %s21, %s33
      %s112 = ssub.s32 %s22, %s29
      %s113 = sor.u32 %s111, %s112
      %p114 = scmp.eq.s32.totalorder %s113, 0
      %s116 = sadd.s32 %s115, 1
      %s117 = scalar_select %p114, %s115, %s116
      %p120 = pneg %p114
      %p121 = scmp.eq.s32.totalorder %s14, 1
      %p122 = por %p120, %p121
      %p123 = scmp.ne.s32.totalorder %s115, %s118
      %p124 = scmp.eq.s32.totalorder %s14, 0
      %p125 = por %p123, %p124
      %p126 = scmp.ne.s32.totalorder %s115, %s118
      %p127 = scmp.eq.s32.totalorder %s19, 1
      %p128 = por %p126, %p127
      %p129 = scmp.ne.s32.totalorder %s118, %s119
      %p130 = scmp.eq.s32.totalorder %s19, 0
      %p131 = por %p129, %p130
      %p132 = scmp.ne.s32.totalorder %s118, %s119
      %p133 = scmp.eq.s32.totalorder %s20, 1
      %p134 = por %p132, %p133
      %p136 = scmp.ne.s32.totalorder %s119, %s135
      %p137 = scmp.eq.s32.totalorder %s20, 0
      %p138 = por %p136, %p137
      %p139 = scmp.le.s32.totalorder 1, %s14
      %p140 = scmp.lt.s32.totalorder %s14, 3
      %p141 = pnand %p139, %p140
      %p142 = pneg %p141
      // Predicated region
      $region9: #{tpu_custom_call.1} parent=5 // pred_check
        _
      $region10: #{tpu_custom_call.1} parent=5 // pred_check_branch
        %144 = sbr.rel (%p141) target = $region12
      $region11: #{tpu_custom_call.1} parent=5 // pred_region
        %s145 = ssub.s32 %s14, 1
        // Predicated region
        $region13: #{tpu_custom_call.1} parent=11 // pred_check
          %p146 = pneg %p75
        $region14: #{tpu_custom_call.1} parent=11 // pred_check_branch
          %148 = sbr.rel (%p146) target = $region16
        $region15: #{tpu_custom_call.1} parent=11 // pred_region
          %s150 = ssub.s32 256, 256
          %151 = vsyncadd [#allocation5], %s150
          %s152 = sshll.u32 [#allocation4], 4
          %s153 = int_to_ptr.vmem [resolvable:$true] %s152
          %158 = dma.hbm_to_vmem [thread:$0]  %s1, 256, %s153, [#allocation5], 64, 64, 4
        $region16: #{tpu_custom_call.1} parent=11 // pred_fallthru
          _
      $region12: #{tpu_custom_call.1} parent=5 // pred_fallthru
        _
      %p159 = scmp.lt.s32.totalorder %s14, 2
      // Predicated region
      $region17: #{tpu_custom_call.1} parent=5 // pred_check
        %p160 = pneg %p159
      $region18: #{tpu_custom_call.1} parent=5 // pred_check_branch
        %162 = sbr.rel (%p160) target = $region20
      $region19: #{tpu_custom_call.1} parent=5 // pred_region
        // Predicated region
        $region21: #{tpu_custom_call.1} parent=19 // pred_check
          %p163 = pneg %p48
        $region22: #{tpu_custom_call.1} parent=19 // pred_check_branch
          %165 = sbr.rel (%p163) target = $region24
        $region23: #{tpu_custom_call.1} parent=19 // pred_region
          %s166 = sand.u32 %s38, 1
          %s167 = scalar_lea.sflag [#allocation3], %s166
          %s168 = sand.u32 %s38, 1
          %s169 = smul.addr %s168, 16
          %s170 = scalar_lea.vmem [#allocation2], %s169
          %s171 = smul.u32 2, %s22
          %s173 = ssub.s32 256, 256
          %174 = vsyncadd %s167, %s173
          %s175 = smul.addr %s21, 2
          %s176 = sadd.s32 %s171, %s175
          %s177 = smul.addr %s176, 128
          %s178 = scalar_lea.hbm %s0, %s177
          %s179 = sshll.u32 %s170, 4
          %s180 = int_to_ptr.vmem [resolvable:$true] %s179
          %185 = dma.hbm_to_vmem [thread:$0]  %s178, 256, %s180, %s167, 128, 128, 8
        $region24: #{tpu_custom_call.1} parent=19 // pred_fallthru
          _
      $region20: #{tpu_custom_call.1} parent=5 // pred_fallthru
        _
      %p186 = scmp.le.s32.totalorder 1, %s14
      %p187 = scmp.lt.s32.totalorder %s14, 3
      %p188 = pnand %p186, %p187
      %p189 = pneg %p188
      // Predicated region
      $region25: #{tpu_custom_call.1} parent=5 // pred_check
        _
      $region26: #{tpu_custom_call.1} parent=5 // pred_check_branch
        %191 = sbr.rel (%p188) target = $region28
      $region27: #{tpu_custom_call.1} parent=5 // pred_region
        %s192 = ssub.s32 %s14, 1
        %s193 = sand.u32 %s41, 1
        %s194 = scalar_lea.sflag [#allocation3], %s193
        %s195 = sand.u32 %s41, 1
        %s196 = smul.addr %s195, 16
        %s197 = scalar_lea.vmem [#allocation2], %s196
        // Predicated region
        $region29: #{tpu_custom_call.1} parent=27 // pred_check
          %p198 = pneg %p54
        $region30: #{tpu_custom_call.1} parent=27 // pred_check_branch
          %200 = sbr.rel (%p198) target = $region32
        $region31: #{tpu_custom_call.1} parent=27 // pred_region
          %201 = dma.done %s194, 256
        $region32: #{tpu_custom_call.1} parent=27 // pred_fallthru
          _
        // Predicated region
        $region33: #{tpu_custom_call.1} parent=27 // pred_check
          %p202 = pneg %p75
        $region34: #{tpu_custom_call.1} parent=27 // pred_check_branch
          %204 = sbr.rel (%p202) target = $region36
        $region35: #{tpu_custom_call.1} parent=27 // pred_region
          %205 = dma.done [#allocation5], 256
        $region36: #{tpu_custom_call.1} parent=27 // pred_fallthru
          _
        %s206 = sand.u32 %s41, 1
        %s207 = scalar_lea.sflag [#allocation3], %s206
        %s208 = sand.u32 %s41, 1
        %s209 = smul.addr %s208, 16
        %s210 = scalar_lea.vmem [#allocation2], %s209
        %p211 = pneg %p54
        %p212 = pneg %p51
        %p213 = pneg %p75
        %p214 = pneg %p72
        %p215 = pneg %p103
        %p216 = pneg %p100
        %s217 = smul.u32 2, %s24
        %p218 = scmp.lt.s32.totalorder %s23, 1
        %s219 = scalar_select %p218, %s23, 1
        %p220 = scmp.lt.s32.totalorder %s217, 1
        %s221 = scalar_select %p220, %s217, 1
        %s222 = smul.addr %s219, 8
        %s223 = sadd.s32 %s221, %s222
        %s224 = smul.addr %s223, 4
        %s225 = scalar_lea.vmem %s2, %s224
        %p226 = pneg %p131
        %p227 = pneg %p128
        %s228 = smul.u32 2, %s24
        %p229 = scmp.lt.s32.totalorder %s23, 1
        %s230 = scalar_select %p229, %s23, 1
        %p231 = scmp.lt.s32.totalorder %s228, 1
        %s232 = scalar_select %p231, %s228, 1
        %s233 = smul.addr %s230, 8
        %s234 = sadd.s32 %s232, %s233
        %s235 = smul.addr %s234, 4
        %s236 = scalar_lea.vmem %s3, %s235
        %s237 = smul.u32 2, %s24
        %s238 = smul.u32 2, %s24
        %p239 = scmp.lt.s32.totalorder %s23, 1
        %s240 = scalar_select %p239, %s23, 1
        %p241 = scmp.lt.s32.totalorder %s238, 1
        %s242 = scalar_select %p241, %s238, 1
        %s243 = smul.addr %s240, 8
        %s244 = sadd.s32 %s242, %s243
        %s245 = smul.addr %s244, 4
        %s246 = scalar_lea.vmem %s2, %s245
        %s247 = smul.u32 2, %s24
        %s248 = smul.u32 2, %s24
        %p249 = scmp.lt.s32.totalorder %s23, 1
        %s250 = scalar_select %p249, %s23, 1
        %p251 = scmp.lt.s32.totalorder %s248, 1
        %s252 = scalar_select %p251, %s248, 1
        %s253 = smul.addr %s250, 8
        %s254 = sadd.s32 %s252, %s253
        %s255 = smul.addr %s254, 4
        %s256 = scalar_lea.vmem %s3, %s255
        %s257 = smul.u32 2, %s24
        %v259 = vld [vmem:[%s197] sm:$0xff]
        %v260 = vld [vmem:[%s197 + $0x8] sm:$0xff]
        %v261 = vpack.c.bf16 %v260, %v259
        %v262 = vld [vmem:[#allocation4] sm:$0xf]
        %v263 = vld [vmem:[#allocation4 + $0x4] sm:$0xf]
        %v264 = vld [vmem:[#allocation4 + $0x8] sm:$0xf]
        %v265 = vld [vmem:[#allocation4 + $0xc] sm:$0xf]
        %v270 = vunpack.c.l.b16 %v262
        %v271 = vunpack.c.l.b16 %v263
        %v272 = vunpack.c.l.b16 %v264
        %v273 = vunpack.c.l.b16 %v265
        %v274 = vpack.c.b16 %v271, %v270
        %v275 = vpack.c.b16 %v273, %v272
        %vm278 = vcmask 261120
        %v280 = vsel %vm278, %v261, 0
        %282 = vmatprep.subr.bf16.mxu0 0
        %283 = vmatpush1.bf16.msra.mxu0 %v274
        %284 = vmatprep.subr.bf16.mxu0 0
        %285 = vmatpush1.bf16.msra.mxu0 %v275
        %286 = vmatprep.subr.bf16.mxu0 0
        %287 = vmatpush1.bf16.msra.mxu0 0
        %288 = vmatprep.subr.bf16.mxu0 0
        %289 = vmatpush1.bf16.msra.mxu0 0
        %290 = vmatprep.subr.bf16.mxu0 0
        %291 = vmatpush1.bf16.msra.mxu0 0
        %292 = vmatprep.subr.bf16.mxu0 0
        %293 = vmatpush1.bf16.msra.mxu0 0
        %294 = vmatprep.subr.bf16.mxu0 0
        %295 = vmatpush1.bf16.msra.mxu0 0
        %296 = vmatprep.subr.bf16.mxu0 0
        %297 = vmatpush1.bf16.msra.mxu0 0
        %298 = vmatprep.subr.bf16.mxu0 0
        %299 = vmatpush1.bf16.msra.mxu0 0
        %300 = vmatprep.subr.bf16.mxu0 0
        %301 = vmatpush1.bf16.msra.mxu0 0
        %302 = vmatprep.subr.bf16.mxu0 0
        %303 = vmatpush1.bf16.msra.mxu0 0
        %304 = vmatprep.subr.bf16.mxu0 0
        %305 = vmatpush1.bf16.msra.mxu0 0
        %306 = vmatprep.subr.bf16.mxu0 0
        %307 = vmatpush1.bf16.msra.mxu0 0
        %308 = vmatprep.subr.bf16.mxu0 0
        %309 = vmatpush1.bf16.msra.mxu0 0
        %310 = vmatprep.subr.bf16.mxu0 0
        %311 = vmatpush1.bf16.msra.mxu0 0
        %312 = vmatprep.subr.bf16.mxu0 0
        %313 = vmatpush1.bf16.msra.mxu0 0
        %314 = vmatprep.mubr.bf16.mxu0 0
        %315 = vmatmul.mubr.bf16.gmra.mrb[0].mxu0 %v280
        %v316 = vpop.f32.mrb[0].mxu0
        %v317 = vadd.f32 0.0, %v316
        %v318 = vpop.f32.mrb[0].mxu0
        %v319 = vpop.f32.mrb[0].mxu0
        %v320 = vadd.f32 0.0, %v319
        %v321 = vpop.f32.mrb[0].mxu0
        %322 = vdwg.mxu0
        %v323 = vpack.c.bf16 %v320, %v317
        %v325 = vunpack.c.l.b16 %v323
        %v326 = vunpack.c.h.b16 %v323
        %v327 = vpack.c.b16 %v325, %v325
        %v328 = vpack.c.b16 %v326, %v326
        %vm331 = vcmask 60416
        %332 = vst.msk [vmem:[%s246] sm:$0xf] %vm331, %v327
        %333 = vst.msk [vmem:[%s246 + $0x4] sm:$0xf] %vm331, %v328
        %334 = vrot.lane.b32.xlu0 %v327, 96
        %v335 = vpop.permute.xlu0 %334
        %336 = vrot.lane.b32.xlu0 %v328, 96
        %v337 = vpop.permute.xlu0 %336
        %340 = vst.msk [vmem:[%s256] sm:$0xf] %vm331, %v335
        %341 = vst.msk [vmem:[%s256 + $0x4] sm:$0xf] %vm331, %v337
        %342 = vrot.lane.b32.xlu0 %v327, 120
        %v343 = vpop.permute.xlu0 %342
        %344 = vrot.lane.b32.xlu0 %v328, 120
        %v345 = vpop.permute.xlu0 %344
        %s348 = scalar_lea.vmem %s246, 8
        %349 = vst.msk [vmem:[%s348] sm:$0xf] %vm331, %v343
        %350 = vst.msk [vmem:[%s348 + $0x4] sm:$0xf] %vm331, %v345
        %351 = vrot.lane.b32.xlu0 %v327, 88
        %v352 = vpop.permute.xlu0 %351
        %353 = vrot.lane.b32.xlu0 %v328, 88
        %v354 = vpop.permute.xlu0 %353
        %s357 = scalar_lea.vmem %s256, 8
        %358 = vst.msk [vmem:[%s357] sm:$0xf] %vm331, %v352
        %359 = vst.msk [vmem:[%s357 + $0x4] sm:$0xf] %vm331, %v354
        %360 = vrot.lane.b32.xlu0 %v327, 112
        %v361 = vpop.permute.xlu0 %360
        %362 = vrot.lane.b32.xlu0 %v328, 112
        %v363 = vpop.permute.xlu0 %362
        %s366 = scalar_lea.vmem %s246, 16
        %367 = vst.msk [vmem:[%s366] sm:$0xf] %vm331, %v361
        %368 = vst.msk [vmem:[%s366 + $0x4] sm:$0xf] %vm331, %v363
        %369 = vrot.lane.b32.xlu0 %v327, 80
        %v370 = vpop.permute.xlu0 %369
        %371 = vrot.lane.b32.xlu0 %v328, 80
        %v372 = vpop.permute.xlu0 %371
        %s375 = scalar_lea.vmem %s256, 16
        %376 = vst.msk [vmem:[%s375] sm:$0xf] %vm331, %v370
        %377 = vst.msk [vmem:[%s375 + $0x4] sm:$0xf] %vm331, %v372
        %378 = vrot.lane.b32.xlu0 %v327, 104
        %v379 = vpop.permute.xlu0 %378
        %380 = vrot.lane.b32.xlu0 %v328, 104
        %v381 = vpop.permute.xlu0 %380
        %s384 = scalar_lea.vmem %s246, 24
        %385 = vst.msk [vmem:[%s384] sm:$0xf] %vm331, %v379
        %386 = vst.msk [vmem:[%s384 + $0x4] sm:$0xf] %vm331, %v381
        %387 = vrot.lane.b32.xlu0 %v327, 72
        %v388 = vpop.permute.xlu0 %387
        %389 = vrot.lane.b32.xlu0 %v328, 72
        %v390 = vpop.permute.xlu0 %389
        %s393 = scalar_lea.vmem %s256, 24
        %394 = vst.msk [vmem:[%s393] sm:$0xf] %vm331, %v388
        %395 = vst.msk [vmem:[%s393 + $0x4] sm:$0xf] %vm331, %v390
        %s396 = smul.u32 2, %s24
        %p397 = scmp.lt.s32.totalorder %s23, 1
        %s398 = scalar_select %p397, %s23, 1
        %p399 = scmp.lt.s32.totalorder %s396, 1
        %s400 = scalar_select %p399, %s396, 1
        %s401 = smul.addr %s398, 8
        %s402 = sadd.s32 %s400, %s401
        %s403 = smul.addr %s402, 4
        %s404 = scalar_lea.vmem %s2, %s403
        %s405 = smul.u32 2, %s24
        %p406 = scmp.lt.s32.totalorder %s23, 1
        %s407 = scalar_select %p406, %s23, 1
        %p408 = scmp.lt.s32.totalorder %s405, 1
        %s409 = scalar_select %p408, %s405, 1
        %s410 = smul.addr %s407, 8
        %s411 = sadd.s32 %s409, %s410
        %s412 = smul.addr %s411, 4
        %s413 = scalar_lea.vmem %s3, %s412
        // Predicated region
        $region37: #{tpu_custom_call.1} parent=27 // pred_check
          %p414 = pneg %p100
        $region38: #{tpu_custom_call.1} parent=27 // pred_check_branch
          %416 = sbr.rel (%p414) target = $region40
        $region39: #{tpu_custom_call.1} parent=27 // pred_region
          %s417 = smul.u32 2, %s24
        $region40: #{tpu_custom_call.1} parent=27 // pred_fallthru
          _
        // Predicated region
        $region41: #{tpu_custom_call.1} parent=27 // pred_check
          %p418 = pneg %p128
        $region42: #{tpu_custom_call.1} parent=27 // pred_check_branch
          %420 = sbr.rel (%p418) target = $region44
        $region43: #{tpu_custom_call.1} parent=27 // pred_region
          %s421 = smul.u32 2, %s24
        $region44: #{tpu_custom_call.1} parent=27 // pred_fallthru
          _
      $region28: #{tpu_custom_call.1} parent=5 // pred_fallthru
        _
      %p422 = scmp.le.s32.totalorder 2, %s14
      // Predicated region
      $region45: #{tpu_custom_call.1} parent=5 // pred_check
        %p423 = pneg %p422
      $region46: #{tpu_custom_call.1} parent=5 // pred_check_branch
        %425 = sbr.rel (%p423) target = $region48
      $region47: #{tpu_custom_call.1} parent=5 // pred_region
        %s426 = ssub.s32 %s14, 2
        // Predicated region
        $region49: #{tpu_custom_call.1} parent=47 // pred_check
          %p427 = pneg %p106
        $region50: #{tpu_custom_call.1} parent=47 // pred_check_branch
          %429 = sbr.rel (%p427) target = $region52
        $region51: #{tpu_custom_call.1} parent=47 // pred_region
          %s430 = smul.u32 2, %s26
          %p431 = scmp.lt.s32.totalorder %s25, 1
          %s432 = scalar_select %p431, %s25, 1
          %p433 = scmp.lt.s32.totalorder %s430, 1
          %s434 = scalar_select %p433, %s430, 1
          %s435 = smul.addr %s432, 8
          %s436 = sadd.s32 %s434, %s435
          %s437 = smul.addr %s436, 4
          %s438 = scalar_lea.vmem %s2, %s437
        $region52: #{tpu_custom_call.1} parent=47 // pred_fallthru
          _
        // Predicated region
        $region53: #{tpu_custom_call.1} parent=47 // pred_check
          %p439 = pneg %p134
        $region54: #{tpu_custom_call.1} parent=47 // pred_check_branch
          %441 = sbr.rel (%p439) target = $region56
        $region55: #{tpu_custom_call.1} parent=47 // pred_region
          %s442 = smul.u32 2, %s26
          %p443 = scmp.lt.s32.totalorder %s25, 1
          %s444 = scalar_select %p443, %s25, 1
          %p445 = scmp.lt.s32.totalorder %s442, 1
          %s446 = scalar_select %p445, %s442, 1
          %s447 = smul.addr %s444, 8
          %s448 = sadd.s32 %s446, %s447
          %s449 = smul.addr %s448, 4
          %s450 = scalar_lea.vmem %s3, %s449
        $region56: #{tpu_custom_call.1} parent=47 // pred_fallthru
          _
      $region48: #{tpu_custom_call.1} parent=5 // pred_fallthru
        _
    $region6: #{tpu_custom_call.1} parent=1 // loop_footer
      %s18 = sadd.s32 1, %s14
    $region7: #{tpu_custom_call.1} parent=1 // loop_footer_branch
      %13 = sbr.rel target = $region3
    $region8: #{tpu_custom_call.1} parent=1 // loop_exit
      _
    %451 = vsyncpa [#allocation3], 1
    %s452 = scalar_lea.sflag [#allocation3], 1
    %453 = vsyncpa %s452, 1
    %454 = vsyncpa [#allocation5], 1

</llo_original>
